<compile_context>
chip_gen: v5e
topology: v5e:2x2
jax: 0.10.0
libtpu: 0.0.40
codegen_flags: <defaults>
</compile_context>

<pallas_src>
import jax
import jax.numpy as jnp
from jax.experimental import pallas as pl
from jax.experimental.pallas import tpu as pltpu

# Scaled-down but structurally identical hyper-params
# (original: HALF = 1024 from wide_resnet101_2's 2048-dim feature vector).
HALF = 32            # half_in_size
LW = 20              # layer_width
NUM_CLASSES = 20
C_PAD = 128          # lane-dense padded class dim
BATCH = 8


def spinal_kernel(x_ref, wa_ref, wb_ref, wd_ref, wo_ref, bh_ref, bo_ref, out_ref):
    def dot(a, b):
        return jnp.dot(a, b, preferred_element_type=jnp.float32)

    x = x_ref[...]                 # (BB, 2*HALF) — single load, split in-regs
    xa = x[:, :HALF]
    xb = x[:, HALF:]

    # Two wide passes over all data-independent "input-half" matmuls.
    pa = dot(xa, wa_ref[...])      # (BB, 2*LW): [:, :LW]=layer1, [:, LW:]=layer3 xa-part
    pb = dot(xb, wb_ref[...])      # (BB, 2*LW): [:, :LW]=layer2 xb-part, [:, LW:]=layer4 xb-part

    # Serial spinal chain — only the K=LW dependent dots remain here.
    x1 = jnp.maximum(pa[:, :LW] + bh_ref[0], 0.0)
    x2 = jnp.maximum(pb[:, :LW] + dot(x1, wd_ref[0]) + bh_ref[1], 0.0)
    x3 = jnp.maximum(pa[:, LW:] + dot(x2, wd_ref[1]) + bh_ref[2], 0.0)
    x4 = jnp.maximum(pb[:, LW:] + dot(x3, wd_ref[2]) + bh_ref[3], 0.0)

    # fc_out: four accumulating dots (no lane-axis concat), lane-dense store.
    out = (dot(x1, wo_ref[0]) + dot(x2, wo_ref[1])
           + dot(x3, wo_ref[2]) + dot(x4, wo_ref[3]) + bo_ref[...])
    out_ref[...] = out.astype(out_ref.dtype)


def init_params(key):
    """Deterministic torch.nn.Linear-style init (uniform +-1/sqrt(fan_in))."""
    def lin(k, fan_in, fan_out):
        kw, kb = jax.random.split(k)
        bound = 1.0 / (fan_in ** 0.5)
        w = jax.random.uniform(kw, (fan_in, fan_out), jnp.float32, -bound, bound)
        b = jax.random.uniform(kb, (1, fan_out), jnp.float32, -bound, bound)
        return w, b

    k1, k2, k3, k4, ko = jax.random.split(key, 5)
    w1, b1 = lin(k1, HALF, LW)
    w2, b2 = lin(k2, HALF + LW, LW)
    w3, b3 = lin(k3, HALF + LW, LW)
    w4, b4 = lin(k4, HALF + LW, LW)
    wo, bo = lin(ko, LW * 4, NUM_CLASSES)
    return (w1, b1, w2, b2, w3, b3, w4, b4, wo, bo)


def pack_params(params):
    """Host-side one-time packing into a few lane/sublane-friendly slabs."""
    w1, b1, w2, b2, w3, b3, w4, b4, wo, bo = params
    # a-side slab: xa feeds layers 1 and 3.   b-side slab: xb feeds layers 2 and 4.
    wa = jnp.concatenate([w1, w3[:HALF]], axis=1)                 # (HALF, 2*LW)
    wb = jnp.concatenate([w2[:HALF], w4[:HALF]], axis=1)          # (HALF, 2*LW)
    # Dependent (serial-chain) weights stacked on a leading axis (cheap static index).
    wd = jnp.stack([w2[HALF:], w3[HALF:], w4[HALF:]], axis=0)     # (3, LW, LW)
    # Output weights: pad class dim to 128 lanes, stack the four LW-row blocks.
    wo_pad = jnp.pad(wo, ((0, 0), (0, C_PAD - NUM_CLASSES)))      # (4*LW, C_PAD)
    wo_slab = wo_pad.reshape(4, LW, C_PAD)                        # (4, LW, C_PAD)
    bh = jnp.stack([b1, b2, b3, b4], axis=0)                      # (4, 1, LW)
    bo_pad = jnp.pad(bo, ((0, 0), (0, C_PAD - NUM_CLASSES)))      # (1, C_PAD)
    return wa, wb, wd, wo_slab, bh, bo_pad


def spinal_forward(x, params, *, block_b=None):
    B = x.shape[0]
    if block_b is None:
        block_b = B if B <= 512 else 512
    assert B % block_b == 0, "batch must be a multiple of the batch tile"
    grid = (B // block_b,)

    wa, wb, wd, wo_slab, bh, bo_pad = pack_params(params)

    out_pad = pl.pallas_call(
        spinal_kernel,
        out_shape=jax.ShapeDtypeStruct((B, C_PAD), jnp.float32),
        grid=grid,
        in_specs=[
            pl.BlockSpec((block_b, 2 * HALF), lambda i: (i, 0)),       # x (batch-tiled)
            pl.BlockSpec((HALF, 2 * LW), lambda i: (0, 0)),            # Wa
            pl.BlockSpec((HALF, 2 * LW), lambda i: (0, 0)),            # Wb
            pl.BlockSpec((3, LW, LW), lambda i: (0, 0, 0)),            # Wdep stack
            pl.BlockSpec((4, LW, C_PAD), lambda i: (0, 0, 0)),         # Wout stack
            pl.BlockSpec((4, 1, LW), lambda i: (0, 0, 0)),             # hidden biases
            pl.BlockSpec((1, C_PAD), lambda i: (0, 0)),                # out bias
        ],
        out_specs=pl.BlockSpec((block_b, C_PAD), lambda i: (i, 0)),
        compiler_params=pltpu.CompilerParams(
            dimension_semantics=("parallel",)),
    )(x, wa, wb, wd, wo_slab, bh, bo_pad)

    return out_pad[:, :NUM_CLASSES]


def reference_forward(x, params):
    """Pure-JAX mirror of the PyTorch forward (with explicit concats)."""
    w1, b1, w2, b2, w3, b3, w4, b4, wo, bo = params
    relu = jax.nn.relu
    xa = x[:, :HALF]
    xb = x[:, HALF:2 * HALF]
    x1 = relu(xa @ w1 + b1)
    x2 = relu(jnp.concatenate([xb, x1], axis=1) @ w2 + b2)
    x3 = relu(jnp.concatenate([xa, x2], axis=1) @ w3 + b3)
    x4 = relu(jnp.concatenate([xb, x3], axis=1) @ w4 + b4)
    h = jnp.concatenate([x1, x2, x3, x4], axis=1)
    return h @ wo + bo


if __name__ == "__main__":
    key = jax.random.PRNGKey(0)
    kx, kp = jax.random.split(key)
    x = jax.random.normal(kx, (BATCH, 2 * HALF), jnp.float32)
    params = init_params(kp)

    out = spinal_forward(x, params)
    out = jax.block_until_ready(out)

    ref = reference_forward(x, params)
    assert out.shape == (BATCH, NUM_CLASSES)
    assert jnp.allclose(out, ref, atol=1e-5, rtol=1e-5), "mismatch vs reference"

    print("KERNEL_OK")
</pallas_src>

<mosaic_0001>
module attributes {stable_mosaic.version = 11 : i64} {
  func.func @spinal_kernel(%arg0: i32, %arg1: memref<8x64xf32, #tpu.memory_space<vmem>>, %arg2: memref<32x40xf32, #tpu.memory_space<vmem>>, %arg3: memref<32x40xf32, #tpu.memory_space<vmem>>, %arg4: memref<3x20x20xf32, #tpu.memory_space<vmem>>, %arg5: memref<4x20x128xf32, #tpu.memory_space<vmem>>, %arg6: memref<4x1x20xf32, #tpu.memory_space<vmem>>, %arg7: memref<1x128xf32, #tpu.memory_space<vmem>>, %arg8: memref<8x128xf32, #tpu.memory_space<vmem>>) attributes {dimension_semantics = [#tpu.dimension_semantics<parallel>], iteration_bounds = array<i64: 1>, scalar_prefetch = 0 : i64, scratch_operands = 0 : i64, tpu.core_type = #tpu.core_type<tc>, window_params = [{transform_indices = @transform_0, window_bounds = array<i64: 8, 64>}, {pipeline_mode = #tpu.pipeline_mode<synchronous>, transform_indices = @transform_1, window_bounds = array<i64: 32, 40>}, {pipeline_mode = #tpu.pipeline_mode<synchronous>, transform_indices = @transform_2, window_bounds = array<i64: 32, 40>}, {pipeline_mode = #tpu.pipeline_mode<synchronous>, transform_indices = @transform_3, window_bounds = array<i64: 3, 20, 20>}, {pipeline_mode = #tpu.pipeline_mode<synchronous>, transform_indices = @transform_4, window_bounds = array<i64: 4, 20, 128>}, {pipeline_mode = #tpu.pipeline_mode<synchronous>, transform_indices = @transform_5, window_bounds = array<i64: 4, 1, 20>}, {pipeline_mode = #tpu.pipeline_mode<synchronous>, transform_indices = @transform_6, window_bounds = array<i64: 1, 128>}, {transform_indices = @transform_7, window_bounds = array<i64: 8, 128>}]} {
    %c0 = arith.constant 0 : index
    %c0_0 = arith.constant 0 : index
    %0 = vector.load %arg1[%c0, %c0_0] : memref<8x64xf32, #tpu.memory_space<vmem>>, vector<8x64xf32>
    %1 = vector.extract_strided_slice %0 {offsets = [0, 0], sizes = [8, 32], strides = [1, 1]} : vector<8x64xf32> to vector<8x32xf32>
    %2 = vector.extract_strided_slice %0 {offsets = [0, 32], sizes = [8, 32], strides = [1, 1]} : vector<8x64xf32> to vector<8x32xf32>
    %c0_1 = arith.constant 0 : index
    %c0_2 = arith.constant 0 : index
    %3 = vector.load %arg2[%c0_1, %c0_2] : memref<32x40xf32, #tpu.memory_space<vmem>>, vector<32x40xf32>
    %cst = arith.constant dense<0.000000e+00> : vector<8x40xf32>
    %4 = tpu.matmul %1, %3, %cst {dimension_numbers = #tpu.dot_dimension_numbers<[1], [0], [0], [1], [0, 0, 1, 1], [], []>} : vector<8x32xf32>, vector<32x40xf32>, vector<8x40xf32> -> vector<8x40xf32>
    %c0_3 = arith.constant 0 : index
    %c0_4 = arith.constant 0 : index
    %5 = vector.load %arg3[%c0_3, %c0_4] : memref<32x40xf32, #tpu.memory_space<vmem>>, vector<32x40xf32>
    %cst_5 = arith.constant dense<0.000000e+00> : vector<8x40xf32>
    %6 = tpu.matmul %2, %5, %cst_5 {dimension_numbers = #tpu.dot_dimension_numbers<[1], [0], [0], [1], [0, 0, 1, 1], [], []>} : vector<8x32xf32>, vector<32x40xf32>, vector<8x40xf32> -> vector<8x40xf32>
    %7 = vector.extract_strided_slice %4 {offsets = [0, 0], sizes = [8, 20], strides = [1, 1]} : vector<8x40xf32> to vector<8x20xf32>
    %c0_6 = arith.constant 0 : index
    %c0_7 = arith.constant 0 : index
    %c0_8 = arith.constant 0 : index
    %8 = vector.load %arg6[%c0_6, %c0_7, %c0_8] : memref<4x1x20xf32, #tpu.memory_space<vmem>>, vector<1x1x20xf32>
    %9 = vector.shape_cast %8 : vector<1x1x20xf32> to vector<1x20xf32>
    %10 = vector.broadcast %9 : vector<1x20xf32> to vector<8x20xf32>
    %11 = arith.addf %7, %10 : vector<8x20xf32>
    %cst_9 = arith.constant 0.000000e+00 : f32
    %12 = vector.broadcast %cst_9 : f32 to vector<8x20xf32>
    %13 = arith.maximumf %11, %12 : vector<8x20xf32>
    %14 = vector.extract_strided_slice %6 {offsets = [0, 0], sizes = [8, 20], strides = [1, 1]} : vector<8x40xf32> to vector<8x20xf32>
    %c0_10 = arith.constant 0 : index
    %c0_11 = arith.constant 0 : index
    %c0_12 = arith.constant 0 : index
    %15 = vector.load %arg4[%c0_10, %c0_11, %c0_12] : memref<3x20x20xf32, #tpu.memory_space<vmem>>, vector<1x20x20xf32>
    %16 = vector.shape_cast %15 : vector<1x20x20xf32> to vector<20x20xf32>
    %cst_13 = arith.constant dense<0.000000e+00> : vector<8x20xf32>
    %17 = tpu.matmul %13, %16, %cst_13 {dimension_numbers = #tpu.dot_dimension_numbers<[1], [0], [0], [1], [0, 0, 1, 1], [], []>} : vector<8x20xf32>, vector<20x20xf32>, vector<8x20xf32> -> vector<8x20xf32>
    %18 = arith.addf %14, %17 : vector<8x20xf32>
    %c1 = arith.constant 1 : index
    %c0_14 = arith.constant 0 : index
    %c0_15 = arith.constant 0 : index
    %19 = vector.load %arg6[%c1, %c0_14, %c0_15] : memref<4x1x20xf32, #tpu.memory_space<vmem>>, vector<1x1x20xf32>
    %20 = vector.shape_cast %19 : vector<1x1x20xf32> to vector<1x20xf32>
    %21 = vector.broadcast %20 : vector<1x20xf32> to vector<8x20xf32>
    %22 = arith.addf %18, %21 : vector<8x20xf32>
    %cst_16 = arith.constant 0.000000e+00 : f32
    %23 = vector.broadcast %cst_16 : f32 to vector<8x20xf32>
    %24 = arith.maximumf %22, %23 : vector<8x20xf32>
    %25 = vector.extract_strided_slice %4 {offsets = [0, 20], sizes = [8, 20], strides = [1, 1]} : vector<8x40xf32> to vector<8x20xf32>
    %c1_17 = arith.constant 1 : index
    %c0_18 = arith.constant 0 : index
    %c0_19 = arith.constant 0 : index
    %26 = vector.load %arg4[%c1_17, %c0_18, %c0_19] : memref<3x20x20xf32, #tpu.memory_space<vmem>>, vector<1x20x20xf32>
    %27 = vector.shape_cast %26 : vector<1x20x20xf32> to vector<20x20xf32>
    %cst_20 = arith.constant dense<0.000000e+00> : vector<8x20xf32>
    %28 = tpu.matmul %24, %27, %cst_20 {dimension_numbers = #tpu.dot_dimension_numbers<[1], [0], [0], [1], [0, 0, 1, 1], [], []>} : vector<8x20xf32>, vector<20x20xf32>, vector<8x20xf32> -> vector<8x20xf32>
    %29 = arith.addf %25, %28 : vector<8x20xf32>
    %c2 = arith.constant 2 : index
    %c0_21 = arith.constant 0 : index
    %c0_22 = arith.constant 0 : index
    %30 = vector.load %arg6[%c2, %c0_21, %c0_22] : memref<4x1x20xf32, #tpu.memory_space<vmem>>, vector<1x1x20xf32>
    %31 = vector.shape_cast %30 : vector<1x1x20xf32> to vector<1x20xf32>
    %32 = vector.broadcast %31 : vector<1x20xf32> to vector<8x20xf32>
    %33 = arith.addf %29, %32 : vector<8x20xf32>
    %cst_23 = arith.constant 0.000000e+00 : f32
    %34 = vector.broadcast %cst_23 : f32 to vector<8x20xf32>
    %35 = arith.maximumf %33, %34 : vector<8x20xf32>
    %36 = vector.extract_strided_slice %6 {offsets = [0, 20], sizes = [8, 20], strides = [1, 1]} : vector<8x40xf32> to vector<8x20xf32>
    %c2_24 = arith.constant 2 : index
    %c0_25 = arith.constant 0 : index
    %c0_26 = arith.constant 0 : index
    %37 = vector.load %arg4[%c2_24, %c0_25, %c0_26] : memref<3x20x20xf32, #tpu.memory_space<vmem>>, vector<1x20x20xf32>
    %38 = vector.shape_cast %37 : vector<1x20x20xf32> to vector<20x20xf32>
    %cst_27 = arith.constant dense<0.000000e+00> : vector<8x20xf32>
    %39 = tpu.matmul %35, %38, %cst_27 {dimension_numbers = #tpu.dot_dimension_numbers<[1], [0], [0], [1], [0, 0, 1, 1], [], []>} : vector<8x20xf32>, vector<20x20xf32>, vector<8x20xf32> -> vector<8x20xf32>
    %40 = arith.addf %36, %39 : vector<8x20xf32>
    %c3 = arith.constant 3 : index
    %c0_28 = arith.constant 0 : index
    %c0_29 = arith.constant 0 : index
    %41 = vector.load %arg6[%c3, %c0_28, %c0_29] : memref<4x1x20xf32, #tpu.memory_space<vmem>>, vector<1x1x20xf32>
    %42 = vector.shape_cast %41 : vector<1x1x20xf32> to vector<1x20xf32>
    %43 = vector.broadcast %42 : vector<1x20xf32> to vector<8x20xf32>
    %44 = arith.addf %40, %43 : vector<8x20xf32>
    %cst_30 = arith.constant 0.000000e+00 : f32
    %45 = vector.broadcast %cst_30 : f32 to vector<8x20xf32>
    %46 = arith.maximumf %44, %45 : vector<8x20xf32>
    %c0_31 = arith.constant 0 : index
    %c0_32 = arith.constant 0 : index
    %c0_33 = arith.constant 0 : index
    %47 = vector.load %arg5[%c0_31, %c0_32, %c0_33] : memref<4x20x128xf32, #tpu.memory_space<vmem>>, vector<1x20x128xf32>
    %48 = vector.shape_cast %47 : vector<1x20x128xf32> to vector<20x128xf32>
    %cst_34 = arith.constant dense<0.000000e+00> : vector<8x128xf32>
    %49 = tpu.matmul %13, %48, %cst_34 {dimension_numbers = #tpu.dot_dimension_numbers<[1], [0], [0], [1], [0, 0, 1, 1], [], []>} : vector<8x20xf32>, vector<20x128xf32>, vector<8x128xf32> -> vector<8x128xf32>
    %c1_35 = arith.constant 1 : index
    %c0_36 = arith.constant 0 : index
    %c0_37 = arith.constant 0 : index
    %50 = vector.load %arg5[%c1_35, %c0_36, %c0_37] : memref<4x20x128xf32, #tpu.memory_space<vmem>>, vector<1x20x128xf32>
    %51 = vector.shape_cast %50 : vector<1x20x128xf32> to vector<20x128xf32>
    %cst_38 = arith.constant dense<0.000000e+00> : vector<8x128xf32>
    %52 = tpu.matmul %24, %51, %cst_38 {dimension_numbers = #tpu.dot_dimension_numbers<[1], [0], [0], [1], [0, 0, 1, 1], [], []>} : vector<8x20xf32>, vector<20x128xf32>, vector<8x128xf32> -> vector<8x128xf32>
    %53 = arith.addf %49, %52 : vector<8x128xf32>
    %c2_39 = arith.constant 2 : index
    %c0_40 = arith.constant 0 : index
    %c0_41 = arith.constant 0 : index
    %54 = vector.load %arg5[%c2_39, %c0_40, %c0_41] : memref<4x20x128xf32, #tpu.memory_space<vmem>>, vector<1x20x128xf32>
    %55 = vector.shape_cast %54 : vector<1x20x128xf32> to vector<20x128xf32>
    %cst_42 = arith.constant dense<0.000000e+00> : vector<8x128xf32>
    %56 = tpu.matmul %35, %55, %cst_42 {dimension_numbers = #tpu.dot_dimension_numbers<[1], [0], [0], [1], [0, 0, 1, 1], [], []>} : vector<8x20xf32>, vector<20x128xf32>, vector<8x128xf32> -> vector<8x128xf32>
    %57 = arith.addf %53, %56 : vector<8x128xf32>
    %c3_43 = arith.constant 3 : index
    %c0_44 = arith.constant 0 : index
    %c0_45 = arith.constant 0 : index
    %58 = vector.load %arg5[%c3_43, %c0_44, %c0_45] : memref<4x20x128xf32, #tpu.memory_space<vmem>>, vector<1x20x128xf32>
    %59 = vector.shape_cast %58 : vector<1x20x128xf32> to vector<20x128xf32>
    %cst_46 = arith.constant dense<0.000000e+00> : vector<8x128xf32>
    %60 = tpu.matmul %46, %59, %cst_46 {dimension_numbers = #tpu.dot_dimension_numbers<[1], [0], [0], [1], [0, 0, 1, 1], [], []>} : vector<8x20xf32>, vector<20x128xf32>, vector<8x128xf32> -> vector<8x128xf32>
    %61 = arith.addf %57, %60 : vector<8x128xf32>
    %c0_47 = arith.constant 0 : index
    %c0_48 = arith.constant 0 : index
    %62 = vector.load %arg7[%c0_47, %c0_48] : memref<1x128xf32, #tpu.memory_space<vmem>>, vector<1x128xf32>
    %63 = vector.broadcast %62 : vector<1x128xf32> to vector<8x128xf32>
    %64 = arith.addf %61, %63 : vector<8x128xf32>
    %c0_49 = arith.constant 0 : index
    %c0_50 = arith.constant 0 : index
    %65 = vector.load %arg8[%c0_49, %c0_50] : memref<8x128xf32, #tpu.memory_space<vmem>>, vector<8x128xf32>
    tpu.vector_store %arg8[%c0_49, %c0_50], %64 {strides = array<i32>} : memref<8x128xf32, #tpu.memory_space<vmem>>, vector<8x128xf32>,
    return
  }
  func.func @transform_0(%arg0: i32) -> (i32, i32) {
    %c0_i32 = arith.constant 0 : i32
    %c0_i32_0 = arith.constant 0 : i32
    return %arg0, %c0_i32 : i32, i32
  }
  func.func @transform_1(%arg0: i32) -> (i32, i32) {
    %c0_i32 = arith.constant 0 : i32
    %c0_i32_0 = arith.constant 0 : i32
    %c0_i32_1 = arith.constant 0 : i32
    return %c0_i32, %c0_i32_0 : i32, i32
  }
  func.func @transform_2(%arg0: i32) -> (i32, i32) {
    %c0_i32 = arith.constant 0 : i32
    %c0_i32_0 = arith.constant 0 : i32
    %c0_i32_1 = arith.constant 0 : i32
    return %c0_i32, %c0_i32_0 : i32, i32
  }
  func.func @transform_3(%arg0: i32) -> (i32, i32, i32) {
    %c0_i32 = arith.constant 0 : i32
    %c0_i32_0 = arith.constant 0 : i32
    %c0_i32_1 = arith.constant 0 : i32
    %c0_i32_2 = arith.constant 0 : i32
    return %c0_i32, %c0_i32_0, %c0_i32_1 : i32, i32, i32
  }
  func.func @transform_4(%arg0: i32) -> (i32, i32, i32) {
    %c0_i32 = arith.constant 0 : i32
    %c0_i32_0 = arith.constant 0 : i32
    %c0_i32_1 = arith.constant 0 : i32
    %c0_i32_2 = arith.constant 0 : i32
    return %c0_i32, %c0_i32_0, %c0_i32_1 : i32, i32, i32
  }
  func.func @transform_5(%arg0: i32) -> (i32, i32, i32) {
    %c0_i32 = arith.constant 0 : i32
    %c0_i32_0 = arith.constant 0 : i32
    %c0_i32_1 = arith.constant 0 : i32
    %c0_i32_2 = arith.constant 0 : i32
    return %c0_i32, %c0_i32_0, %c0_i32_1 : i32, i32, i32
  }
  func.func @transform_6(%arg0: i32) -> (i32, i32) {
    %c0_i32 = arith.constant 0 : i32
    %c0_i32_0 = arith.constant 0 : i32
    %c0_i32_1 = arith.constant 0 : i32
    return %c0_i32, %c0_i32_0 : i32, i32
  }
  func.func @transform_7(%arg0: i32) -> (i32, i32) {
    %c0_i32 = arith.constant 0 : i32
    %c0_i32_0 = arith.constant 0 : i32
    return %arg0, %c0_i32 : i32, i32
  }
}

</mosaic_0001>

<llo_original>
// kernel: tpu_custom_call.1
$region0: #{tpu_custom_call.1}
  #allocation0 [shape = 'u32[]', space=smem, size = 0x4, offset = 0x4, fixed_abs, tag = 'smem constant byte address 0x4 - core index']
  #allocation1 [shape = 'u32[72,128]{1,0:T(1,128)}', space=vmem, size = 0x9000, scoped, tag = 'internal scratch']
  %s0 = inlined_call_operand.vmem [shape: f32[8,64], index: 0, kind: input, shape index: {}]
  %s1 = inlined_call_operand.vmem [shape: f32[32,40], index: 1, kind: input, shape index: {}]
  %s2 = inlined_call_operand.vmem [shape: f32[32,40], index: 2, kind: input, shape index: {}]
  %s3 = inlined_call_operand.vmem [shape: f32[3,20,20], index: 3, kind: input, shape index: {}]
  %s4 = inlined_call_operand.vmem [shape: f32[4,20,128], index: 4, kind: input, shape index: {}]
  %s5 = inlined_call_operand.vmem [shape: f32[4,1,20], index: 5, kind: input, shape index: {}]
  %s6 = inlined_call_operand.vmem [shape: f32[1,128], index: 6, kind: input, shape index: {}]
  %s7 = inlined_call_operand.hbm [shape: f32[8,128], index: 7, kind: output, shape index: {}]
  %s8 = sld [smem:[#allocation0]]
  $region38: #{tpu_custom_call.1} parent=0
    _
  %s10 = ssub.s32 1, %s8
  %s11 = scalar_select 0, %s10, %s8
  $region1: #{tpu_custom_call.1} parent=0
    #allocation2 [shape = 'u8[4096]{0}', space=vmem, size = 0x1000, scoped, tag = 'output window, operand 0, single buffered']
    #allocation3 [shape = 's32[1]{0}', space=sflag, size = 0x4, scoped, tag = 'scoped memory for tpu_custom_call.1']
    %12 = vsyncpa [#allocation3], 0
    // Predicated region
    $region2: #{tpu_custom_call.1} parent=1 // pred_check
      _
    $region3: #{tpu_custom_call.1} parent=1 // pred_check_branch
      %14 = sbr.rel (0) target = $region5
    $region4: #{tpu_custom_call.1} parent=1 // pred_region
      _
    $region5: #{tpu_custom_call.1} parent=1 // pred_fallthru
      _
    // Predicated region
    $region6: #{tpu_custom_call.1} parent=1 // pred_check
      _
    $region7: #{tpu_custom_call.1} parent=1 // pred_check_branch
      %16 = sbr.rel (0) target = $region9
    $region8: #{tpu_custom_call.1} parent=1 // pred_region
      _
    $region9: #{tpu_custom_call.1} parent=1 // pred_fallthru
      _
    // Predicated region
    $region10: #{tpu_custom_call.1} parent=1 // pred_check
      _
    $region11: #{tpu_custom_call.1} parent=1 // pred_check_branch
      %18 = sbr.rel (0) target = $region13
    $region12: #{tpu_custom_call.1} parent=1 // pred_region
      _
    $region13: #{tpu_custom_call.1} parent=1 // pred_fallthru
      _
    // Predicated region
    $region14: #{tpu_custom_call.1} parent=1 // pred_check
      _
    $region15: #{tpu_custom_call.1} parent=1 // pred_check_branch
      %20 = sbr.rel (0) target = $region17
    $region16: #{tpu_custom_call.1} parent=1 // pred_region
      _
    $region17: #{tpu_custom_call.1} parent=1 // pred_fallthru
      _
    // Predicated region
    $region18: #{tpu_custom_call.1} parent=1 // pred_check
      _
    $region19: #{tpu_custom_call.1} parent=1 // pred_check_branch
      %22 = sbr.rel (0) target = $region21
    $region20: #{tpu_custom_call.1} parent=1 // pred_region
      _
    $region21: #{tpu_custom_call.1} parent=1 // pred_fallthru
      _
    // Predicated region
    $region22: #{tpu_custom_call.1} parent=1 // pred_check
      _
    $region23: #{tpu_custom_call.1} parent=1 // pred_check_branch
      %24 = sbr.rel (0) target = $region25
    $region24: #{tpu_custom_call.1} parent=1 // pred_region
      _
    $region25: #{tpu_custom_call.1} parent=1 // pred_fallthru
      _
    // Predicated region
    $region26: #{tpu_custom_call.1} parent=1 // pred_check
      _
    $region27: #{tpu_custom_call.1} parent=1 // pred_check_branch
      %26 = sbr.rel (0) target = $region29
    $region28: #{tpu_custom_call.1} parent=1 // pred_region
      _
    $region29: #{tpu_custom_call.1} parent=1 // pred_fallthru
      _
    %v27 = vld [vmem:[%s0] sm:$0xff]
    %v28 = vld [vmem:[%s1] sm:$0xff]
    %v29 = vld [vmem:[%s1 + $0x8] sm:$0xff]
    %v30 = vld [vmem:[%s1 + $0x10] sm:$0xff]
    %v31 = vld [vmem:[%s1 + $0x18] sm:$0xff]
    %vm32 = vcmask 261120
    %v34 = vsel %vm32, %v27, 0
    %36 = vmatpush.msra.mxu0 0.0
    %37 = vmatpush.msra.mxu0 0.0
    %38 = vmatpush.msra.mxu0 0.0
    %39 = vmatpush.msra.mxu0 0.0
    %40 = vmatpush.msra.mxu0 0.0
    %41 = vmatpush.msra.mxu0 0.0
    %42 = vmatpush.msra.mxu0 0.0
    %43 = vmatpush.msra.mxu0 0.0
    %44 = vmatpush.msra.mxu0 0.0
    %45 = vmatpush.msra.mxu0 0.0
    %46 = vmatpush.msra.mxu0 0.0
    %47 = vmatpush.msra.mxu0 0.0
    %48 = vmatpush.msra.mxu0 %v31
    %49 = vmatpush.msra.mxu0 %v30
    %50 = vmatpush.msra.mxu0 %v29
    %51 = vmatpush.msra.mxu0 %v28
    %52 = vmatmul.f32.gmra.mxu0 %v34
    %v53 = vpop.f32.mrf.mxu0
    %v54 = vadd.f32 0.0, %v53
    %55 = vdwg.mxu0
    %v56 = vld [vmem:[%s2] sm:$0xff]
    %v57 = vld [vmem:[%s2 + $0x8] sm:$0xff]
    %v58 = vld [vmem:[%s2 + $0x10] sm:$0xff]
    %v59 = vld [vmem:[%s2 + $0x18] sm:$0xff]
    %60 = vrot.lane.b32.xlu0 %v27, 96
    %v61 = vpop.permute.xlu0 %60
    %v62 = vsel %vm32, %v61, 0
    %64 = vmatpush.msra.mxu0 0.0
    %65 = vmatpush.msra.mxu0 0.0
    %66 = vmatpush.msra.mxu0 0.0
    %67 = vmatpush.msra.mxu0 0.0
    %68 = vmatpush.msra.mxu0 0.0
    %69 = vmatpush.msra.mxu0 0.0
    %70 = vmatpush.msra.mxu0 0.0
    %71 = vmatpush.msra.mxu0 0.0
    %72 = vmatpush.msra.mxu0 0.0
    %73 = vmatpush.msra.mxu0 0.0
    %74 = vmatpush.msra.mxu0 0.0
    %75 = vmatpush.msra.mxu0 0.0
    %76 = vmatpush.msra.mxu0 %v59
    %77 = vmatpush.msra.mxu0 %v58
    %78 = vmatpush.msra.mxu0 %v57
    %79 = vmatpush.msra.mxu0 %v56
    %80 = vmatmul.f32.gmra.mxu0 %v62
    %v81 = vpop.f32.mrf.mxu0
    %v82 = vadd.f32 0.0, %v81
    %83 = vdwg.mxu0
    %v84 = vld [vmem:[%s5] sm:$0x1]
    %v86 = vperm.slane %v84, 0
    %v88 = vadd.f32 %v54, %v86
    %v89 = vmax.f32 %v88, 0.0
    %v90 = vld [vmem:[%s3] sm:$0xff]
    %v91 = vld [vmem:[%s3 + $0x8] sm:$0xff]
    %v92 = vld [vmem:[%s3 + $0x10] sm:$0xf]
    %vm93 = vcmask 162816
    %v95 = vsel %vm93, %v89, 0
    %vm97 = vcmask 1043456
    %v99 = vsel %vm97, %v92, 0
    %101 = vmatpush.msra.mxu0 0.0
    %102 = vmatpush.msra.mxu0 0.0
    %103 = vmatpush.msra.mxu0 0.0
    %104 = vmatpush.msra.mxu0 0.0
    %105 = vmatpush.msra.mxu0 0.0
    %106 = vmatpush.msra.mxu0 0.0
    %107 = vmatpush.msra.mxu0 0.0
    %108 = vmatpush.msra.mxu0 0.0
    %109 = vmatpush.msra.mxu0 0.0
    %110 = vmatpush.msra.mxu0 0.0
    %111 = vmatpush.msra.mxu0 0.0
    %112 = vmatpush.msra.mxu0 0.0
    %113 = vmatpush.msra.mxu0 0.0
    %114 = vmatpush.msra.mxu0 %v99
    %115 = vmatpush.msra.mxu0 %v91
    %116 = vmatpush.msra.mxu0 %v90
    %117 = vmatmul.f32.gmra.mxu0 %v95
    %v118 = vpop.f32.mrf.mxu0
    %v119 = vadd.f32 0.0, %v118
    %120 = vdwg.mxu0
    %v121 = vadd.f32 %v82, %v119
    %s122 = scalar_lea.vmem %s5, 1
    %v123 = vld [vmem:[%s122] sm:$0x1]
    %v125 = vperm.slane %v123, 0
    %v127 = vadd.f32 %v121, %v125
    %v128 = vmax.f32 %v127, 0.0
    %s129 = scalar_lea.vmem %s3, 24
    %v130 = vld [vmem:[%s129] sm:$0xff]
    %v131 = vld [vmem:[%s129 + $0x8] sm:$0xff]
    %v132 = vld [vmem:[%s129 + $0x10] sm:$0xf]
    %v134 = vsel %vm93, %v128, 0
    %v137 = vsel %vm97, %v132, 0
    %139 = vmatpush.msra.mxu0 0.0
    %140 = vmatpush.msra.mxu0 0.0
    %141 = vmatpush.msra.mxu0 0.0
    %142 = vmatpush.msra.mxu0 0.0
    %143 = vmatpush.msra.mxu0 0.0
    %144 = vmatpush.msra.mxu0 0.0
    %145 = vmatpush.msra.mxu0 0.0
    %146 = vmatpush.msra.mxu0 0.0
    %147 = vmatpush.msra.mxu0 0.0
    %148 = vmatpush.msra.mxu0 0.0
    %149 = vmatpush.msra.mxu0 0.0
    %150 = vmatpush.msra.mxu0 0.0
    %151 = vmatpush.msra.mxu0 0.0
    %152 = vmatpush.msra.mxu0 %v137
    %153 = vmatpush.msra.mxu0 %v131
    %154 = vmatpush.msra.mxu0 %v130
    %155 = vmatmul.f32.gmra.mxu0 %v134
    %v156 = vpop.f32.mrf.mxu0
    %v157 = vadd.f32 0.0, %v156
    %158 = vdwg.mxu0
    %160 = vrot.lane.b32.xlu0 %v157, 20
    %v161 = vpop.permute.xlu0 %160
    %v163 = vadd.f32 %v54, %v161
    %s164 = scalar_lea.vmem %s5, 2
    %v165 = vld [vmem:[%s164] sm:$0x1]
    %v167 = vperm.slane %v165, 0
    %168 = vrot.lane.b32.xlu0 %v167, 20
    %v169 = vpop.permute.xlu0 %168
    %v171 = vadd.f32 %v163, %v169
    %v172 = vmax.f32 %v171, 0.0
    %s173 = scalar_lea.vmem %s3, 48
    %v174 = vld [vmem:[%s173] sm:$0xff]
    %v175 = vld [vmem:[%s173 + $0x8] sm:$0xff]
    %v176 = vld [vmem:[%s173 + $0x10] sm:$0xf]
    %178 = vrot.lane.b32.xlu0 %v172, 108
    %v179 = vpop.permute.xlu0 %178
    %v180 = vsel %vm93, %v179, 0
    %v183 = vsel %vm97, %v176, 0
    %185 = vmatpush.msra.mxu0 0.0
    %186 = vmatpush.msra.mxu0 0.0
    %187 = vmatpush.msra.mxu0 0.0
    %188 = vmatpush.msra.mxu0 0.0
    %189 = vmatpush.msra.mxu0 0.0
    %190 = vmatpush.msra.mxu0 0.0
    %191 = vmatpush.msra.mxu0 0.0
    %192 = vmatpush.msra.mxu0 0.0
    %193 = vmatpush.msra.mxu0 0.0
    %194 = vmatpush.msra.mxu0 0.0
    %195 = vmatpush.msra.mxu0 0.0
    %196 = vmatpush.msra.mxu0 0.0
    %197 = vmatpush.msra.mxu0 0.0
    %198 = vmatpush.msra.mxu0 %v183
    %199 = vmatpush.msra.mxu0 %v175
    %200 = vmatpush.msra.mxu0 %v174
    %201 = vmatmul.f32.gmra.mxu0 %v180
    %v202 = vpop.f32.mrf.mxu0
    %v203 = vadd.f32 0.0, %v202
    %204 = vdwg.mxu0
    %206 = vrot.lane.b32.xlu0 %v203, 20
    %v207 = vpop.permute.xlu0 %206
    %v209 = vadd.f32 %v82, %v207
    %s210 = scalar_lea.vmem %s5, 3
    %v211 = vld [vmem:[%s210] sm:$0x1]
    %v213 = vperm.slane %v211, 0
    %214 = vrot.lane.b32.xlu0 %v213, 20
    %v215 = vpop.permute.xlu0 %214
    %v217 = vadd.f32 %v209, %v215
    %v218 = vmax.f32 %v217, 0.0
    %v219 = vld [vmem:[%s4] sm:$0xff]
    %v220 = vld [vmem:[%s4 + $0x8] sm:$0xff]
    %v221 = vld [vmem:[%s4 + $0x10] sm:$0xf]
    %s222 = scalar_lea.vmem %s4, 24
    %v223 = vld [vmem:[%s222] sm:$0xff]
    %v224 = vld [vmem:[%s222 + $0x8] sm:$0xff]
    %v225 = vld [vmem:[%s222 + $0x10] sm:$0xf]
    %v227 = vsel %vm97, %v225, 0
    %229 = vmatpush.msra.mxu0 0.0
    %230 = vmatpush.msra.mxu0 0.0
    %231 = vmatpush.msra.mxu0 0.0
    %232 = vmatpush.msra.mxu0 0.0
    %233 = vmatpush.msra.mxu0 0.0
    %234 = vmatpush.msra.mxu0 0.0
    %235 = vmatpush.msra.mxu0 0.0
    %236 = vmatpush.msra.mxu0 0.0
    %237 = vmatpush.msra.mxu0 0.0
    %238 = vmatpush.msra.mxu0 0.0
    %239 = vmatpush.msra.mxu0 0.0
    %240 = vmatpush.msra.mxu0 0.0
    %241 = vmatpush.msra.mxu0 0.0
    %242 = vmatpush.msra.mxu0 %v227
    %243 = vmatpush.msra.mxu0 %v224
    %244 = vmatpush.msra.mxu0 %v223
    %245 = vmatmul.f32.gmra.mxu0 %v134
    %v246 = vpop.f32.mrf.mxu0
    %v247 = vadd.f32 0.0, %v246
    %248 = vdwg.mxu0
    %v250 = vsel %vm97, %v221, 0
    %252 = vmatpush.msra.mxu0 0.0
    %253 = vmatpush.msra.mxu0 0.0
    %254 = vmatpush.msra.mxu0 0.0
    %255 = vmatpush.msra.mxu0 0.0
    %256 = vmatpush.msra.mxu0 0.0
    %257 = vmatpush.msra.mxu0 0.0
    %258 = vmatpush.msra.mxu0 0.0
    %259 = vmatpush.msra.mxu0 0.0
    %260 = vmatpush.msra.mxu0 0.0
    %261 = vmatpush.msra.mxu0 0.0
    %262 = vmatpush.msra.mxu0 0.0
    %263 = vmatpush.msra.mxu0 0.0
    %264 = vmatpush.msra.mxu0 0.0
    %265 = vmatpush.msra.mxu0 %v250
    %266 = vmatpush.msra.mxu0 %v220
    %267 = vmatpush.msra.mxu0 %v219
    %268 = vmatmul.f32.gmra.mxu0 %v95
    %v269 = vpop.f32.mrf.mxu0
    %v270 = vadd.f32 %v247, %v269
    %271 = vdwg.mxu0
    %s272 = scalar_lea.vmem %s4, 48
    %v273 = vld [vmem:[%s272] sm:$0xff]
    %v274 = vld [vmem:[%s272 + $0x8] sm:$0xff]
    %v275 = vld [vmem:[%s272 + $0x10] sm:$0xf]
    %v277 = vsel %vm97, %v275, 0
    %279 = vmatpush.msra.mxu0 0.0
    %280 = vmatpush.msra.mxu0 0.0
    %281 = vmatpush.msra.mxu0 0.0
    %282 = vmatpush.msra.mxu0 0.0
    %283 = vmatpush.msra.mxu0 0.0
    %284 = vmatpush.msra.mxu0 0.0
    %285 = vmatpush.msra.mxu0 0.0
    %286 = vmatpush.msra.mxu0 0.0
    %287 = vmatpush.msra.mxu0 0.0
    %288 = vmatpush.msra.mxu0 0.0
    %289 = vmatpush.msra.mxu0 0.0
    %290 = vmatpush.msra.mxu0 0.0
    %291 = vmatpush.msra.mxu0 0.0
    %292 = vmatpush.msra.mxu0 %v277
    %293 = vmatpush.msra.mxu0 %v274
    %294 = vmatpush.msra.mxu0 %v273
    %295 = vmatmul.f32.gmra.mxu0 %v180
    %v296 = vpop.f32.mrf.mxu0
    %v297 = vadd.f32 0.0, %v296
    %298 = vdwg.mxu0
    %v299 = vadd.f32 %v270, %v297
    %s300 = scalar_lea.vmem %s4, 72
    %v301 = vld [vmem:[%s300] sm:$0xff]
    %v302 = vld [vmem:[%s300 + $0x8] sm:$0xff]
    %v303 = vld [vmem:[%s300 + $0x10] sm:$0xf]
    %305 = vrot.lane.b32.xlu0 %v218, 108
    %v306 = vpop.permute.xlu0 %305
    %v307 = vsel %vm93, %v306, 0
    %v310 = vsel %vm97, %v303, 0
    %312 = vmatpush.msra.mxu0 0.0
    %313 = vmatpush.msra.mxu0 0.0
    %314 = vmatpush.msra.mxu0 0.0
    %315 = vmatpush.msra.mxu0 0.0
    %316 = vmatpush.msra.mxu0 0.0
    %317 = vmatpush.msra.mxu0 0.0
    %318 = vmatpush.msra.mxu0 0.0
    %319 = vmatpush.msra.mxu0 0.0
    %320 = vmatpush.msra.mxu0 0.0
    %321 = vmatpush.msra.mxu0 0.0
    %322 = vmatpush.msra.mxu0 0.0
    %323 = vmatpush.msra.mxu0 0.0
    %324 = vmatpush.msra.mxu0 0.0
    %325 = vmatpush.msra.mxu0 %v310
    %326 = vmatpush.msra.mxu0 %v302
    %327 = vmatpush.msra.mxu0 %v301
    %328 = vmatmul.f32.gmra.mxu0 %v307
    %v329 = vpop.f32.mrf.mxu0
    %v330 = vadd.f32 0.0, %v329
    %331 = vdwg.mxu0
    %v332 = vadd.f32 %v299, %v330
    %v333 = vld [vmem:[%s6] sm:$0x1]
    %v335 = vperm.slane %v333, 0
    %v337 = vadd.f32 %v332, %v335
    %338 = vst [vmem:[#allocation2] sm:$0xff] %v337
    // Predicated region
    $region30: #{tpu_custom_call.1} parent=1 // pred_check
      _
    $region31: #{tpu_custom_call.1} parent=1 // pred_check_branch
      %340 = sbr.rel (0) target = $region33
    $region32: #{tpu_custom_call.1} parent=1 // pred_region
      %342 = vsyncadd [#allocation3], 0
      %s344 = sshll.u32 [#allocation2], 4
      %s345 = int_to_ptr.vmem [resolvable:$true] %s344
      %s346 = sshll.u32 %s7, 4
      %s347 = int_to_ptr.hbm [resolvable:$true] %s346
      %349 = dma.vmem_to_hbm [thread:$0]  %s345, 128, %s347, [#allocation3]
    $region33: #{tpu_custom_call.1} parent=1 // pred_fallthru
      _
    // Predicated region
    $region34: #{tpu_custom_call.1} parent=1 // pred_check
      _
    $region35: #{tpu_custom_call.1} parent=1 // pred_check_branch
      %351 = sbr.rel (0) target = $region37
    $region36: #{tpu_custom_call.1} parent=1 // pred_region
      %353 = dma.done [#allocation3], 128
    $region37: #{tpu_custom_call.1} parent=1 // pred_fallthru
      _
    %354 = vsyncpa [#allocation3], 1

</llo_original>
